<compile_context>
chip_gen: v5e
topology: v5e:2x2
jax: 0.10.0
libtpu: 0.0.40
codegen_flags: <defaults>
</compile_context>

<pallas_src>
import numpy as np
import jax
import jax.numpy as jnp
from jax.experimental import pallas as pl
from jax.experimental.pallas import tpu as pltpu


# ----------------------------------------------------------------------------
# Kernel: one lane-dense matmul tile + bias add
# ----------------------------------------------------------------------------
def linear_module_kernel(x_ref, m_ref, b_ref, o_ref):
    # x_ref: (TB, L)   m_ref: (L, L)   b_ref: (1, L) f32   o_ref: (TB, L)
    y = jnp.dot(x_ref[...], m_ref[...], preferred_element_type=jnp.float32)
    o_ref[...] = (y + b_ref[...]).astype(o_ref.dtype)


def _choose_tile_rows(rows, *, max_tile=4096, min_tile=512, min_steps=8):
    """Pick a batch-tile (rows of the lane-dense view).

    Targets MiB-class blocks (4096 rows * 128 lanes * 4B = 2 MiB) while
    keeping >= min_steps grid steps so v7x's two TensorCores both pipeline.
    Small problems get a single full-extent block (satisfies the (8,128)
    rule via the 'equal to full dim' escape hatch).
    """
    if rows <= max(min_tile, 8):
        return rows
    tb = min(max_tile, max(min_tile, pl.cdiv(rows, min_steps)))
    tb = max(8, (tb // 8) * 8)          # sublane multiple
    return rows if tb >= rows else tb


def linear_module_forward(x, Mk, bk, group):
    """x: (B, d) -> x @ M + b, computed lane-densely as (B/G, G*d) @ kron(I_G, M)."""
    B, d = x.shape
    L = group * d

    # Pad only to the G-row kron granularity (<= group-1 rows).
    B_pad = pl.cdiv(B, group) * group
    if B_pad != B:
        x = jnp.pad(x, ((0, B_pad - B), (0, 0)))
    rows = B_pad // group
    xr = x.reshape(rows, L)             # free row-major-contiguous reshape

    TB = _choose_tile_rows(rows)
    grid = (pl.cdiv(rows, TB),)         # ragged last block handled by Pallas

    itemsize = jnp.dtype(x.dtype).itemsize
    m_itemsize = jnp.dtype(Mk.dtype).itemsize
    # VMEM budget: double-buffered in + out blocks, 2x (M + bias) constants
    # (constant-index_map inputs still get 2 buffers), plus headroom.
    # Capped at 48 MiB so v7x's 64 MiB per-TC VMEM keeps Mosaic scratch room.
    block_bytes = TB * L * itemsize
    const_bytes = 2 * (L * L * m_itemsize + L * 4)
    vmem_limit = int(min(48 * 1024 * 1024,
                         max(8 * 1024 * 1024,
                             4 * block_bytes + const_bytes + 4 * 1024 * 1024)))

    cost = pl.CostEstimate(
        flops=2 * rows * L * L,
        transcendentals=0,
        bytes_accessed=2 * rows * L * itemsize + L * L * m_itemsize + L * 4,
    )

    out = pl.pallas_call(
        linear_module_kernel,
        out_shape=jax.ShapeDtypeStruct((rows, L), x.dtype),
        grid=grid,
        in_specs=[
            pl.BlockSpec((TB, L), lambda i: (i, 0)),   # x: batch-tiled, 128-lane dense
            pl.BlockSpec((L, L), lambda i: (0, 0)),    # kron(I_G, M), constant
            pl.BlockSpec((1, L), lambda i: (0, 0)),    # tiled bias, constant
        ],
        out_specs=pl.BlockSpec((TB, L), lambda i: (i, 0)),
        compiler_params=pltpu.CompilerParams(
            dimension_semantics=("parallel",),
            vmem_limit_bytes=vmem_limit,
        ),
        cost_estimate=cost,
    )(xr, Mk, bk)

    out = out.reshape(B_pad, d)
    return out[:B] if B_pad != B else out


# ----------------------------------------------------------------------------
# Parameter init + offline composition (plain numpy/JAX glue, not in kernel)
# ----------------------------------------------------------------------------
def init_params(key, dim, h, layers, sublayers):
    """S_{ij} ~ N(0, 1) * h with shape (dim-1, 1); b = zeros(dim)."""
    params = {}
    for i in range(layers):
        for j in range(sublayers):
            key, sub = jax.random.split(key)
            params[f"S{i + 1}{j + 1}"] = (
                jax.random.normal(sub, (dim - 1, 1), jnp.float32) * h
            )
    params["b"] = jnp.zeros((dim,), jnp.float32)
    return params


def compose_shear_matrix(params, dim, layers, sublayers):
    """M = E_1 @ E_2 @ ... with E_t = I + s_vec_t e_{p_t}^T  (float64 offline)."""
    M = np.eye(dim, dtype=np.float64)
    for i in range(layers):
        for j in range(sublayers):
            S = np.asarray(params[f"S{i + 1}{j + 1}"], np.float64)[:, 0]  # (d-1,)
            p = (i + (j % 2)) % dim                 # pivot (matches torch `(i + j % 2) % d`)
            s_vec = np.concatenate([S[:p], np.zeros(1), S[p:]])
            E = np.eye(dim, dtype=np.float64)
            E[:, p] += s_vec                        # s_vec[p] == 0, diag stays 1
            M = M @ E
    return M


def build_kernel_operands(params, dim, layers, sublayers, dtype=jnp.float32):
    """Compose M in float64, lane-densify via kron(I_G, M), tile the bias."""
    M = compose_shear_matrix(params, dim, layers, sublayers)      # (d, d) f64
    if dim <= 64 and 128 % dim == 0:
        group = 128 // dim
    else:
        group = 1                                   # already lane-dense (or indivisible)
    Mk = np.kron(np.eye(group, dtype=np.float64), M)              # (G*d, G*d)
    bk = np.tile(np.asarray(params["b"], np.float64), group)[None, :]  # (1, G*d)
    return jnp.asarray(Mk, dtype), jnp.asarray(bk, jnp.float32), group


def reference_forward(x, params, dim, layers, sublayers):
    """Pure-JAX transcription of the PyTorch forward, for verification."""
    d = dim
    for i in range(layers):
        for j in range(sublayers):
            S = params[f"S{i + 1}{j + 1}"]
            p = (i + (j % 2)) % d
            if p == 0:
                y = x[..., p:p + 1] + x[..., p + 1:] @ S[p:]
            elif p == d - 1:
                y = x[..., p:p + 1] + x[..., :p] @ S[:p]
            else:
                y = x[..., p:p + 1] + x[..., :p] @ S[:p] + x[..., p + 1:] @ S[p:]
            x = jnp.concatenate([x[..., :p], y, x[..., p + 1:]], axis=-1)
    return x + params["b"]


if __name__ == "__main__":
    dim, layers, sublayers, h = 4, 2, 2, 0.01
    batch = 1000                                    # not a multiple of 32: exercises G-pad

    key = jax.random.PRNGKey(0)
    pkey, xkey = jax.random.split(key)

    params = init_params(pkey, dim, h, layers, sublayers)
    Mk, bk, group = build_kernel_operands(params, dim, layers, sublayers, jnp.float32)

    x = jax.random.normal(xkey, (batch, dim), jnp.float32)

    out = linear_module_forward(x, Mk, bk, group)
    out = jax.block_until_ready(out)

    ref = reference_forward(x, params, dim, layers, sublayers)
    assert out.shape == (batch, dim)
    assert jnp.allclose(out, ref, atol=1e-4, rtol=1e-4), "mismatch vs reference"

    print("KERNEL_OK")
</pallas_src>

<mosaic_0001>
module attributes {stable_mosaic.version = 11 : i64} {
  func.func @linear_module_kernel(%arg0: i32, %arg1: memref<32x128xf32, #tpu.memory_space<vmem>>, %arg2: memref<128x128xf32, #tpu.memory_space<vmem>>, %arg3: memref<1x128xf32, #tpu.memory_space<vmem>>, %arg4: memref<32x128xf32, #tpu.memory_space<vmem>>) attributes {dimension_semantics = [#tpu.dimension_semantics<parallel>], iteration_bounds = array<i64: 1>, scalar_prefetch = 0 : i64, scratch_operands = 0 : i64, tpu.core_type = #tpu.core_type<tc>, window_params = [{transform_indices = @transform_0, window_bounds = array<i64: 32, 128>}, {pipeline_mode = #tpu.pipeline_mode<synchronous>, transform_indices = @transform_1, window_bounds = array<i64: 128, 128>}, {pipeline_mode = #tpu.pipeline_mode<synchronous>, transform_indices = @transform_2, window_bounds = array<i64: 1, 128>}, {transform_indices = @transform_3, window_bounds = array<i64: 32, 128>}]} {
    %c0 = arith.constant 0 : index
    %c0_0 = arith.constant 0 : index
    %0 = vector.load %arg1[%c0, %c0_0] : memref<32x128xf32, #tpu.memory_space<vmem>>, vector<32x128xf32>
    %c0_1 = arith.constant 0 : index
    %c0_2 = arith.constant 0 : index
    %1 = vector.load %arg2[%c0_1, %c0_2] : memref<128x128xf32, #tpu.memory_space<vmem>>, vector<128x128xf32>
    %cst = arith.constant dense<0.000000e+00> : vector<32x128xf32>
    %2 = tpu.matmul %0, %1, %cst {dimension_numbers = #tpu.dot_dimension_numbers<[1], [0], [0], [1], [0, 0, 1, 1], [], []>} : vector<32x128xf32>, vector<128x128xf32>, vector<32x128xf32> -> vector<32x128xf32>
    %c0_3 = arith.constant 0 : index
    %c0_4 = arith.constant 0 : index
    %3 = vector.load %arg3[%c0_3, %c0_4] : memref<1x128xf32, #tpu.memory_space<vmem>>, vector<1x128xf32>
    %4 = vector.broadcast %3 : vector<1x128xf32> to vector<32x128xf32>
    %5 = arith.addf %2, %4 : vector<32x128xf32>
    %c0_5 = arith.constant 0 : index
    %c0_6 = arith.constant 0 : index
    %6 = vector.load %arg4[%c0_5, %c0_6] : memref<32x128xf32, #tpu.memory_space<vmem>>, vector<32x128xf32>
    tpu.vector_store %arg4[%c0_5, %c0_6], %5 {strides = array<i32>} : memref<32x128xf32, #tpu.memory_space<vmem>>, vector<32x128xf32>,
    return
  }
  func.func @transform_0(%arg0: i32) -> (i32, i32) {
    %c0_i32 = arith.constant 0 : i32
    %c0_i32_0 = arith.constant 0 : i32
    return %arg0, %c0_i32 : i32, i32
  }
  func.func @transform_1(%arg0: i32) -> (i32, i32) {
    %c0_i32 = arith.constant 0 : i32
    %c0_i32_0 = arith.constant 0 : i32
    %c0_i32_1 = arith.constant 0 : i32
    return %c0_i32, %c0_i32_0 : i32, i32
  }
  func.func @transform_2(%arg0: i32) -> (i32, i32) {
    %c0_i32 = arith.constant 0 : i32
    %c0_i32_0 = arith.constant 0 : i32
    %c0_i32_1 = arith.constant 0 : i32
    return %c0_i32, %c0_i32_0 : i32, i32
  }
  func.func @transform_3(%arg0: i32) -> (i32, i32) {
    %c0_i32 = arith.constant 0 : i32
    %c0_i32_0 = arith.constant 0 : i32
    return %arg0, %c0_i32 : i32, i32
  }
}

</mosaic_0001>

<llo_original>
// kernel: tpu_custom_call.1
$region0: #{tpu_custom_call.1}
  #allocation0 [shape = 'u32[]', space=smem, size = 0x4, offset = 0x4, fixed_abs, tag = 'smem constant byte address 0x4 - core index']
  #allocation1 [shape = 'u32[72,128]{1,0:T(1,128)}', space=vmem, size = 0x9000, scoped, tag = 'internal scratch']
  %s0 = inlined_call_operand.hbm [shape: f32[32,128], index: 0, kind: input, shape index: {}]
  %s1 = inlined_call_operand.hbm [shape: f32[128,128], index: 1, kind: input, shape index: {}]
  %s2 = inlined_call_operand.vmem [shape: f32[1,128], index: 2, kind: input, shape index: {}]
  %s3 = inlined_call_operand.hbm [shape: f32[32,128], index: 3, kind: output, shape index: {}]
  %s4 = sld [smem:[#allocation0]]
  $region30: #{tpu_custom_call.1} parent=0
    _
  %s6 = ssub.s32 1, %s4
  %s7 = scalar_select 0, %s6, %s4
  $region1: #{tpu_custom_call.1} parent=0
    #allocation2 [shape = 'u8[16384]{0}', space=vmem, size = 0x4000, scoped, tag = 'input window, operand 0, single buffered']
    #allocation3 [shape = 's32[1]{0}', space=sflag, size = 0x4, scoped, tag = 'scoped memory for tpu_custom_call.1']
    #allocation4 [shape = 's32[1]{0}', space=sflag, size = 0x4, scoped, tag = 'scoped memory for tpu_custom_call.1']
    #allocation5 [shape = 'u8[65536]{0}', space=vmem, size = 0x10000, scoped, tag = 'input window, operand 1, single buffered']
    #allocation6 [shape = 's32[1]{0}', space=sflag, size = 0x4, scoped, tag = 'scoped memory for tpu_custom_call.1']
    #allocation7 [shape = 'u8[16384]{0}', space=vmem, size = 0x4000, scoped, tag = 'output window, operand 0, single buffered']
    %8 = vsyncpa [#allocation3], 0
    %9 = vsyncpa [#allocation6], 0
    %10 = vsyncpa [#allocation4], 0
    // Predicated region
    $region2: #{tpu_custom_call.1} parent=1 // pred_check
      _
    $region3: #{tpu_custom_call.1} parent=1 // pred_check_branch
      %12 = sbr.rel (0) target = $region5
    $region4: #{tpu_custom_call.1} parent=1 // pred_region
      %14 = vsyncadd [#allocation3], 0
      %s15 = sshll.u32 %s0, 4
      %s16 = int_to_ptr.hbm [resolvable:$true] %s15
      %s17 = sshll.u32 [#allocation2], 4
      %s18 = int_to_ptr.vmem [resolvable:$true] %s17
      %23 = dma.hbm_to_vmem [thread:$0]  %s16, 512, %s18, [#allocation3], 128, 128, 8
    $region5: #{tpu_custom_call.1} parent=1 // pred_fallthru
      _
    // Predicated region
    $region6: #{tpu_custom_call.1} parent=1 // pred_check
      _
    $region7: #{tpu_custom_call.1} parent=1 // pred_check_branch
      %25 = sbr.rel (0) target = $region9
    $region8: #{tpu_custom_call.1} parent=1 // pred_region
      %27 = vsyncadd [#allocation6], 0
      %s28 = sshll.u32 %s1, 4
      %s29 = int_to_ptr.hbm [resolvable:$true] %s28
      %s30 = sshll.u32 [#allocation5], 4
      %s31 = int_to_ptr.vmem [resolvable:$true] %s30
      %36 = dma.hbm_to_vmem [thread:$0]  %s29, 2048, %s31, [#allocation6], 128, 128, 8
    $region9: #{tpu_custom_call.1} parent=1 // pred_fallthru
      _
    // Predicated region
    $region10: #{tpu_custom_call.1} parent=1 // pred_check
      _
    $region11: #{tpu_custom_call.1} parent=1 // pred_check_branch
      %38 = sbr.rel (0) target = $region13
    $region12: #{tpu_custom_call.1} parent=1 // pred_region
      _
    $region13: #{tpu_custom_call.1} parent=1 // pred_fallthru
      _
    // Predicated region
    $region14: #{tpu_custom_call.1} parent=1 // pred_check
      _
    $region15: #{tpu_custom_call.1} parent=1 // pred_check_branch
      %40 = sbr.rel (0) target = $region17
    $region16: #{tpu_custom_call.1} parent=1 // pred_region
      %42 = dma.done [#allocation3], 512
    $region17: #{tpu_custom_call.1} parent=1 // pred_fallthru
      _
    // Predicated region
    $region18: #{tpu_custom_call.1} parent=1 // pred_check
      _
    $region19: #{tpu_custom_call.1} parent=1 // pred_check_branch
      %44 = sbr.rel (0) target = $region21
    $region20: #{tpu_custom_call.1} parent=1 // pred_region
      %46 = dma.done [#allocation6], 2048
    $region21: #{tpu_custom_call.1} parent=1 // pred_fallthru
      _
    %v47 = vld [vmem:[#allocation2] sm:$0xff]
    %v48 = vld [vmem:[#allocation2 + $0x8] sm:$0xff]
    %v49 = vld [vmem:[#allocation2 + $0x10] sm:$0xff]
    %v50 = vld [vmem:[#allocation2 + $0x18] sm:$0xff]
    %v51 = vld [vmem:[#allocation5] sm:$0xff]
    %v52 = vld [vmem:[#allocation5 + $0x8] sm:$0xff]
    %v53 = vld [vmem:[#allocation5 + $0x10] sm:$0xff]
    %v54 = vld [vmem:[#allocation5 + $0x18] sm:$0xff]
    %v55 = vld [vmem:[#allocation5 + $0x20] sm:$0xff]
    %v56 = vld [vmem:[#allocation5 + $0x28] sm:$0xff]
    %v57 = vld [vmem:[#allocation5 + $0x30] sm:$0xff]
    %v58 = vld [vmem:[#allocation5 + $0x38] sm:$0xff]
    %v59 = vld [vmem:[#allocation5 + $0x40] sm:$0xff]
    %v60 = vld [vmem:[#allocation5 + $0x48] sm:$0xff]
    %v61 = vld [vmem:[#allocation5 + $0x50] sm:$0xff]
    %v62 = vld [vmem:[#allocation5 + $0x58] sm:$0xff]
    %v63 = vld [vmem:[#allocation5 + $0x60] sm:$0xff]
    %v64 = vld [vmem:[#allocation5 + $0x68] sm:$0xff]
    %v65 = vld [vmem:[#allocation5 + $0x70] sm:$0xff]
    %v66 = vld [vmem:[#allocation5 + $0x78] sm:$0xff]
    %v67 = vld [vmem:[%s2] sm:$0x1]
    %v69 = vperm.slane %v67, 0
    %71 = vmatpush.msra.mxu0 %v66
    %72 = vmatpush.msra.mxu0 %v65
    %73 = vmatpush.msra.mxu0 %v64
    %74 = vmatpush.msra.mxu0 %v63
    %75 = vmatpush.msra.mxu0 %v62
    %76 = vmatpush.msra.mxu0 %v61
    %77 = vmatpush.msra.mxu0 %v60
    %78 = vmatpush.msra.mxu0 %v59
    %79 = vmatpush.msra.mxu0 %v58
    %80 = vmatpush.msra.mxu0 %v57
    %81 = vmatpush.msra.mxu0 %v56
    %82 = vmatpush.msra.mxu0 %v55
    %83 = vmatpush.msra.mxu0 %v54
    %84 = vmatpush.msra.mxu0 %v53
    %85 = vmatpush.msra.mxu0 %v52
    %86 = vmatpush.msra.mxu0 %v51
    %87 = vmatmul.f32.gmra.mxu0 %v47
    %v88 = vpop.f32.mrf.mxu0
    %v89 = vadd.f32 %v69, %v88
    %90 = vmatmul.f32.gmra.mxu0 %v48
    %v91 = vpop.f32.mrf.mxu0
    %v92 = vadd.f32 %v69, %v91
    %93 = vmatmul.f32.gmra.mxu0 %v49
    %v94 = vpop.f32.mrf.mxu0
    %v95 = vadd.f32 %v69, %v94
    %96 = vmatmul.f32.gmra.mxu0 %v50
    %v97 = vpop.f32.mrf.mxu0
    %v98 = vadd.f32 %v69, %v97
    %99 = vdwg.mxu0
    %100 = vst [vmem:[#allocation7] sm:$0xff] %v89
    %101 = vst [vmem:[#allocation7 + $0x8] sm:$0xff] %v92
    %102 = vst [vmem:[#allocation7 + $0x10] sm:$0xff] %v95
    %103 = vst [vmem:[#allocation7 + $0x18] sm:$0xff] %v98
    // Predicated region
    $region22: #{tpu_custom_call.1} parent=1 // pred_check
      _
    $region23: #{tpu_custom_call.1} parent=1 // pred_check_branch
      %105 = sbr.rel (0) target = $region25
    $region24: #{tpu_custom_call.1} parent=1 // pred_region
      %107 = vsyncadd [#allocation4], 0
      %s108 = sshll.u32 [#allocation7], 4
      %s109 = int_to_ptr.vmem [resolvable:$true] %s108
      %s110 = sshll.u32 %s3, 4
      %s111 = int_to_ptr.hbm [resolvable:$true] %s110
      %116 = dma.vmem_to_hbm [thread:$0]  %s109, 512, %s111, [#allocation4], 128, 128, 8
    $region25: #{tpu_custom_call.1} parent=1 // pred_fallthru
      _
    // Predicated region
    $region26: #{tpu_custom_call.1} parent=1 // pred_check
      _
    $region27: #{tpu_custom_call.1} parent=1 // pred_check_branch
      %118 = sbr.rel (0) target = $region29
    $region28: #{tpu_custom_call.1} parent=1 // pred_region
      %120 = dma.done [#allocation4], 512
    $region29: #{tpu_custom_call.1} parent=1 // pred_fallthru
      _
    %121 = vsyncpa [#allocation3], 1
    %122 = vsyncpa [#allocation6], 1
    %123 = vsyncpa [#allocation4], 1

</llo_original>
